<compile_context>
chip_gen: v5e
topology: v5e:2x2
jax: 0.10.0
libtpu: 0.0.40
codegen_flags: <defaults>
</compile_context>

<pallas_src>
import numpy as np
import jax
import jax.numpy as jnp
from jax import lax
from jax.experimental import pallas as pl
from jax.experimental.pallas import tpu as pltpu


# ---------------------------------------------------------------------------
# Structure-element helpers (pure numpy, identical math to the PyTorch file).
# ---------------------------------------------------------------------------
def _ellipse_in_shape(shape, center, radii, rotation=0.0):
    r_lim, c_lim = np.ogrid[0:float(shape[0]), 0:float(shape[1])]
    r_org, c_org = center
    r_rad, c_rad = radii
    rotation %= np.pi
    sin_alpha, cos_alpha = np.sin(rotation), np.cos(rotation)
    r, c = (r_lim - r_org, c_lim - c_org)
    distances = ((r * cos_alpha + c * sin_alpha) / r_rad) ** 2 + \
                ((r * sin_alpha - c * cos_alpha) / c_rad) ** 2
    return np.nonzero(distances < 1)


def ellipse(r, c, r_radius, c_radius, shape=None, rotation=0.0):
    center = np.array([r, c])
    radii = np.array([r_radius, c_radius])
    rotation %= np.pi
    r_radius_rot = abs(r_radius * np.cos(rotation)) + c_radius * np.sin(rotation)
    c_radius_rot = r_radius * np.sin(rotation) + abs(c_radius * np.cos(rotation))
    radii_rot = np.array([r_radius_rot, c_radius_rot])
    upper_left = np.ceil(center - radii_rot).astype(int)
    lower_right = np.floor(center + radii_rot).astype(int)
    if shape is not None:
        upper_left = np.maximum(upper_left, np.array([0, 0]))
        lower_right = np.minimum(lower_right, np.array(shape[:2]) - 1)
    shifted_center = center - upper_left
    bounding_shape = lower_right - upper_left + 1
    rr, cc = _ellipse_in_shape(bounding_shape, shifted_center, radii, rotation)
    rr = np.array(rr) + upper_left[0]
    cc = np.array(cc) + upper_left[1]
    return rr, cc


def circle(r, c, radius, shape=None):
    return ellipse(r, c, radius, radius, shape)


def build_structure_element(margin):
    assert margin % 2 != 0, "Margin should be odd"
    rr, cc = circle(margin / 2, margin / 2, margin / 2 + 1, shape=(margin, margin))
    se = np.zeros((margin, margin), dtype=np.float32)
    se[rr, cc] = 1.0
    return se


def build_labels_and_objects(label_np, fixed_depth, min_fragment=10):
    """Host-side (numpy) part of build_halo_mask: per-image one-hot object masks.

    Data-dependent bincount / object-list construction -- kept on host (glue),
    just as the original code runs it in numpy on CPU.
    """
    n, h, w = label_np.shape
    back = np.zeros((n, fixed_depth, h, w), dtype=np.float32)
    object_list = []
    for i in range(n):
        bincount = np.bincount(label_np[i].flatten())
        pixels = np.where(bincount > min_fragment)[0]
        if len(pixels) > fixed_depth:
            pixels = pixels[:fixed_depth]
        l = 0
        for l, v in enumerate(pixels):
            back[i, l, label_np[i] == v] = 1.0
        object_list.append(np.arange(l + 1))
    return back, object_list


# ---------------------------------------------------------------------------
# Pallas kernel 1: per-image +1/-1/0 "combo" map for the selected channel.
#   +1 : labels > 0                     (positive region)
#   -1 : labels == 0 and dilation > 0   (negative / halo region)
#    0 : neither
# Dilation uses a horizontal prefix sum (one MXU matmul against an
# upper-triangular matrix) and one range-difference per disk row.
# ---------------------------------------------------------------------------
def _make_halo_combo_kernel(H, W, pad, runs):
    def kernel(padded_ref, tri_ref, combo_ref):
        p = padded_ref[0]                                  # (Hp, Wp)
        lab = p[pad:pad + H, pad:pad + W]                  # (H, W)
        # cs[i, j] = sum_{j' < j} p[i, j']   -> exact integer counts in f32
        cs = jnp.dot(p, tri_ref[...], preferred_element_type=jnp.float32)
        acc = jnp.zeros((H, W), jnp.float32)
        for (ki, lo, hi) in runs:                          # one contiguous run per disk row
            acc = acc + (cs[ki:ki + H, hi + 1:hi + 1 + W] -
                         cs[ki:ki + H, lo:lo + W])
        combo_ref[0] = jnp.where(lab > 0.0, 1.0,
                                 jnp.where(acc > 0.0, -1.0, 0.0))
    return kernel


def halo_combo_pallas(lab_c, runs, margin):
    """lab_c: (N, H, W) binary f32 labels of the selected channel."""
    N, H, W = lab_c.shape
    pad = (margin - 1) // 2
    padded = jnp.pad(lab_c, ((0, 0), (pad, pad), (pad, pad)))   # only the one channel
    Hp, Wp = H + 2 * pad, W + 2 * pad
    Wp1 = Wp + 1
    # strict upper-triangular ones: tri[j', j] = 1 iff j' < j  (prefix-sum operator)
    tri = (jnp.arange(Wp, dtype=jnp.int32)[:, None] <
           jnp.arange(Wp1, dtype=jnp.int32)[None, :]).astype(jnp.float32)

    kernel = _make_halo_combo_kernel(H, W, pad, runs)
    return pl.pallas_call(
        kernel,
        out_shape=jax.ShapeDtypeStruct((N, H, W), jnp.float32),
        grid=(N,),
        in_specs=[pl.BlockSpec((1, Hp, Wp), lambda b: (b, 0, 0)),
                  pl.BlockSpec((Wp, Wp1), lambda b: (0, 0))],
        out_specs=pl.BlockSpec((1, H, W), lambda b: (b, 0, 0)),
        compiler_params=pltpu.CompilerParams(
            dimension_semantics=("parallel",)),
    )(padded, tri)


# ---------------------------------------------------------------------------
# Pallas kernel 2: HW-tiled masked region sums (MXU) + per-image cosine.
# grid = (N, HW // T); per-image accumulators in VMEM scratch; cosine finalised
# on the last tile of each image and written once to the (1,1) output block.
# Cosine is scale-invariant, so region *sums* replace region means (no counts,
# no divisions in the hot path).  Batch axis is "parallel" (megacore on v7x).
# ---------------------------------------------------------------------------
def _loss_kernel(emb_ref, combo_ref, out_ref, acc_p_ref, acc_n_ref):
    t = pl.program_id(1)
    nt = pl.num_programs(1)

    @pl.when(t == 0)
    def _():
        acc_p_ref[...] = jnp.zeros_like(acc_p_ref)
        acc_n_ref[...] = jnp.zeros_like(acc_n_ref)

    emb = emb_ref[0]                                   # (D, T)
    combo = combo_ref[0]                               # (1, T)
    pos = (combo > 0.0).astype(jnp.float32)            # mask_pos
    neg = (combo < 0.0).astype(jnp.float32)            # mask_neg

    dn = (((1,), (1,)), ((), ()))                      # contract the HW-tile axis
    acc_p_ref[...] = acc_p_ref[...] + lax.dot_general(
        emb, pos, dn, preferred_element_type=jnp.float32)     # (D, 1) on the MXU
    acc_n_ref[...] = acc_n_ref[...] + lax.dot_general(
        emb, neg, dn, preferred_element_type=jnp.float32)     # (D, 1)

    @pl.when(t == nt - 1)
    def _():
        ap = acc_p_ref[...]                            # (D, 1) region_pos * count_pos
        an = acc_n_ref[...]                            # (D, 1) region_neg * count_neg
        # cosine(mean_pos, mean_neg) == cosine(sum_pos, sum_neg)  (scale-invariant)
        dot = jnp.sum(ap * an)
        norm = jnp.sqrt(jnp.sum(ap * ap)) * jnp.sqrt(jnp.sum(an * an))
        out_ref[0, 0] = dot / jnp.maximum(norm, jnp.float32(1e-8))


def _pick_hw_tile(hw, emb_dim, target_bytes=4 * 1024 * 1024):
    """Largest HW tile that divides HW, is a multiple of 128 (or == HW), and
    keeps the f32 embedding block around `target_bytes` so it double-buffers
    within the default scoped-VMEM limit of every TPU generation."""
    max_t = max(128, target_bytes // (4 * emb_dim))
    if hw <= max_t:
        return hw
    t = (max_t // 128) * 128
    while t >= 128:
        if hw % t == 0:
            return t
        t -= 128
    return hw   # fallback: no aligned divisor found -> single tile


def halo_cosine_loss_pallas(emb_flat, combo_flat):
    N, D, HW = emb_flat.shape
    T = _pick_hw_tile(HW, D)
    nt = HW // T
    per_image = pl.pallas_call(
        _loss_kernel,
        out_shape=jax.ShapeDtypeStruct((N, 1), jnp.float32),
        grid=(N, nt),
        in_specs=[pl.BlockSpec((1, D, T), lambda b, t: (b, 0, t)),
                  pl.BlockSpec((1, 1, T), lambda b, t: (b, 0, t))],
        out_specs=pl.BlockSpec((1, 1), lambda b, t: (b, 0)),
        scratch_shapes=[pltpu.VMEM((D, 1), jnp.float32),
                        pltpu.VMEM((D, 1), jnp.float32)],
        compiler_params=pltpu.CompilerParams(
            dimension_semantics=("parallel", "arbitrary")),
    )(emb_flat, combo_flat)
    return jnp.sum(per_image)


# ---------------------------------------------------------------------------
# Module wrapper
# ---------------------------------------------------------------------------
class HaloCosineEmbeddingLossPallas:
    def __init__(self, num_classes=3, halo_margin=15):
        self.num_classes = num_classes
        self.halo_margin = halo_margin
        self.min_fragment = 10
        # deterministic "parameter": disk structuring element (margin, margin)
        self.sel = build_structure_element(halo_margin)
        # per-row contiguous runs of the disk (used by the dilation kernel)
        self.runs = []
        for ki in range(halo_margin):
            cols = np.where(self.sel[ki] > 0)[0]
            if cols.size:
                lo, hi = int(cols[0]), int(cols[-1])
                assert cols.size == hi - lo + 1, "disk row must be contiguous"
                self.runs.append((ki, lo, hi))

    def __call__(self, embeddings, class_labels, class_idx):
        N, D, H, W = embeddings.shape
        label_np = np.asarray(class_labels)
        # TODO(synk): data-dependent bincount / object-list construction stays
        # on host (numpy), exactly as the original PyTorch code runs it on CPU.
        back, objects = build_labels_and_objects(label_np, self.num_classes,
                                                 self.min_fragment)
        c = int(class_idx)
        # index_select(0, objects[b]) keeps channel order, so channel c of the
        # one-hot labels is exactly what the PyTorch loss reads; validate it.
        assert all(c < len(o) for o in objects), "class_idx out of range"

        # Only the selected channel ever reaches the device.
        lab_c = jnp.asarray(back[:, c])                         # (N, H, W) f32
        if c == 0:
            # channel 0's halo weight is constant > 0 everywhere -> no dilation
            combo = jnp.where(lab_c > 0.0, 1.0, -1.0).astype(jnp.float32)
        else:
            combo = halo_combo_pallas(lab_c, self.runs, self.halo_margin)

        emb_flat = embeddings.reshape(N, D, H * W)
        combo_flat = combo.reshape(N, 1, H * W)
        return halo_cosine_loss_pallas(emb_flat, combo_flat)


# ---------------------------------------------------------------------------
# Pure-JAX reference (faithful to the PyTorch forward; correctness check only).
# ---------------------------------------------------------------------------
def reference_loss(embeddings, labels, sel_np, class_idx):
    N, C, H, W = labels.shape
    D = embeddings.shape[1]
    m = sel_np.shape[0]
    kernel = jnp.tile(jnp.asarray(sel_np, jnp.float32).reshape(1, 1, m, m),
                      (C, 1, 1, 1))
    conv = jax.lax.conv_general_dilated(
        labels, kernel, window_strides=(1, 1), padding="SAME",
        feature_group_count=C, dimension_numbers=("NCHW", "OIHW", "NCHW"))
    masks = jnp.where(conv > 0, 1.0, 0.0)
    masks = jnp.where(labels > 0, 2.0, masks)
    masks = masks.at[:, 0].set(1.0)
    weights = jnp.sum(masks, axis=(-1, -2), keepdims=True)
    weights = jnp.where(weights == 0.0, 1.0, weights)
    masks = masks / weights
    loss = jnp.float32(0.0)
    c = class_idx
    for b in range(N):
        lab = labels[b, c].reshape(-1)
        hal = masks[b, c].reshape(-1)
        pos = ((lab * hal) != 0).astype(jnp.float32)
        neg = (((1.0 - lab) * hal) != 0).astype(jnp.float32)
        emb = embeddings[b].reshape(D, -1)
        rp = jnp.sum(emb * pos, axis=1) / jnp.sum(pos)
        rn = jnp.sum(emb * neg, axis=1) / jnp.sum(neg)
        cos = jnp.sum(rp * rn) / jnp.maximum(
            jnp.linalg.norm(rp) * jnp.linalg.norm(rn), 1e-8)
        loss = loss + cos
    return loss


if __name__ == "__main__":
    # small shapes consistent with the module (module uses N x 32 x 512 x 512)
    N, D, H, W = 2, 32, 32, 32
    num_classes, halo_margin, class_idx = 3, 15, 1

    key = jax.random.PRNGKey(0)
    k_emb, k_lab = jax.random.split(key)
    embeddings = jax.random.normal(k_emb, (N, D, H, W), dtype=jnp.float32)
    class_labels = jax.random.randint(k_lab, (N, H, W), 0, num_classes,
                                      dtype=jnp.int32)

    loss_fn = HaloCosineEmbeddingLossPallas(num_classes=num_classes,
                                            halo_margin=halo_margin)
    loss = loss_fn(embeddings, class_labels, class_idx)
    jax.block_until_ready(loss)

    # correctness check against a pure-JAX reference of the same forward pass
    back, _ = build_labels_and_objects(np.asarray(class_labels), num_classes, 10)
    ref = reference_loss(embeddings, jnp.asarray(back), loss_fn.sel, class_idx)
    np.testing.assert_allclose(np.asarray(loss), np.asarray(ref),
                               rtol=1e-3, atol=1e-3)

    # also exercise the class_idx == 0 (no-dilation) fast path
    loss0 = loss_fn(embeddings, class_labels, 0)
    jax.block_until_ready(loss0)
    ref0 = reference_loss(embeddings, jnp.asarray(back), loss_fn.sel, 0)
    np.testing.assert_allclose(np.asarray(loss0), np.asarray(ref0),
                               rtol=1e-3, atol=1e-3)

    print("KERNEL_OK")
</pallas_src>

<mosaic_0001>
module attributes {stable_mosaic.version = 11 : i64} {
  func.func @kernel(%arg0: i32, %arg1: memref<1x46x46xf32, #tpu.memory_space<vmem>>, %arg2: memref<46x47xf32, #tpu.memory_space<vmem>>, %arg3: memref<1x32x32xf32, #tpu.memory_space<vmem>>) attributes {dimension_semantics = [#tpu.dimension_semantics<parallel>], iteration_bounds = array<i64: 2>, scalar_prefetch = 0 : i64, scratch_operands = 0 : i64, tpu.core_type = #tpu.core_type<tc>, window_params = [{transform_indices = @transform_0, window_bounds = array<i64: 1, 46, 46>}, {pipeline_mode = #tpu.pipeline_mode<synchronous>, transform_indices = @transform_1, window_bounds = array<i64: 46, 47>}, {transform_indices = @transform_2, window_bounds = array<i64: 1, 32, 32>}]} {
    %c0 = arith.constant 0 : index
    %c0_0 = arith.constant 0 : index
    %c0_1 = arith.constant 0 : index
    %0 = vector.load %arg1[%c0, %c0_0, %c0_1] : memref<1x46x46xf32, #tpu.memory_space<vmem>>, vector<1x46x46xf32>
    %1 = vector.shape_cast %0 : vector<1x46x46xf32> to vector<46x46xf32>
    %2 = vector.extract_strided_slice %1 {offsets = [7, 7], sizes = [32, 32], strides = [1, 1]} : vector<46x46xf32> to vector<32x32xf32>
    %c0_2 = arith.constant 0 : index
    %c0_3 = arith.constant 0 : index
    %3 = vector.load %arg2[%c0_2, %c0_3] : memref<46x47xf32, #tpu.memory_space<vmem>>, vector<46x47xf32>
    %cst = arith.constant dense<0.000000e+00> : vector<46x47xf32>
    %4 = tpu.matmul %1, %3, %cst {dimension_numbers = #tpu.dot_dimension_numbers<[1], [0], [0], [1], [0, 0, 1, 1], [], []>} : vector<46x46xf32>, vector<46x47xf32>, vector<46x47xf32> -> vector<46x47xf32>
    %cst_4 = arith.constant 0.000000e+00 : f32
    %5 = vector.broadcast %cst_4 : f32 to vector<32x32xf32>
    %6 = vector.extract_strided_slice %4 {offsets = [0, 12], sizes = [32, 32], strides = [1, 1]} : vector<46x47xf32> to vector<32x32xf32>
    %7 = vector.extract_strided_slice %4 {offsets = [0, 4], sizes = [32, 32], strides = [1, 1]} : vector<46x47xf32> to vector<32x32xf32>
    %8 = arith.subf %6, %7 : vector<32x32xf32>
    %9 = arith.addf %5, %8 : vector<32x32xf32>
    %10 = vector.extract_strided_slice %4 {offsets = [1, 13], sizes = [32, 32], strides = [1, 1]} : vector<46x47xf32> to vector<32x32xf32>
    %11 = vector.extract_strided_slice %4 {offsets = [1, 3], sizes = [32, 32], strides = [1, 1]} : vector<46x47xf32> to vector<32x32xf32>
    %12 = arith.subf %10, %11 : vector<32x32xf32>
    %13 = arith.addf %9, %12 : vector<32x32xf32>
    %14 = vector.extract_strided_slice %4 {offsets = [2, 14], sizes = [32, 32], strides = [1, 1]} : vector<46x47xf32> to vector<32x32xf32>
    %15 = vector.extract_strided_slice %4 {offsets = [2, 2], sizes = [32, 32], strides = [1, 1]} : vector<46x47xf32> to vector<32x32xf32>
    %16 = arith.subf %14, %15 : vector<32x32xf32>
    %17 = arith.addf %13, %16 : vector<32x32xf32>
    %18 = vector.extract_strided_slice %4 {offsets = [3, 15], sizes = [32, 32], strides = [1, 1]} : vector<46x47xf32> to vector<32x32xf32>
    %19 = vector.extract_strided_slice %4 {offsets = [3, 1], sizes = [32, 32], strides = [1, 1]} : vector<46x47xf32> to vector<32x32xf32>
    %20 = arith.subf %18, %19 : vector<32x32xf32>
    %21 = arith.addf %17, %20 : vector<32x32xf32>
    %22 = vector.extract_strided_slice %4 {offsets = [4, 15], sizes = [32, 32], strides = [1, 1]} : vector<46x47xf32> to vector<32x32xf32>
    %23 = vector.extract_strided_slice %4 {offsets = [4, 0], sizes = [32, 32], strides = [1, 1]} : vector<46x47xf32> to vector<32x32xf32>
    %24 = arith.subf %22, %23 : vector<32x32xf32>
    %25 = arith.addf %21, %24 : vector<32x32xf32>
    %26 = vector.extract_strided_slice %4 {offsets = [5, 15], sizes = [32, 32], strides = [1, 1]} : vector<46x47xf32> to vector<32x32xf32>
    %27 = vector.extract_strided_slice %4 {offsets = [5, 0], sizes = [32, 32], strides = [1, 1]} : vector<46x47xf32> to vector<32x32xf32>
    %28 = arith.subf %26, %27 : vector<32x32xf32>
    %29 = arith.addf %25, %28 : vector<32x32xf32>
    %30 = vector.extract_strided_slice %4 {offsets = [6, 15], sizes = [32, 32], strides = [1, 1]} : vector<46x47xf32> to vector<32x32xf32>
    %31 = vector.extract_strided_slice %4 {offsets = [6, 0], sizes = [32, 32], strides = [1, 1]} : vector<46x47xf32> to vector<32x32xf32>
    %32 = arith.subf %30, %31 : vector<32x32xf32>
    %33 = arith.addf %29, %32 : vector<32x32xf32>
    %34 = vector.extract_strided_slice %4 {offsets = [7, 15], sizes = [32, 32], strides = [1, 1]} : vector<46x47xf32> to vector<32x32xf32>
    %35 = vector.extract_strided_slice %4 {offsets = [7, 0], sizes = [32, 32], strides = [1, 1]} : vector<46x47xf32> to vector<32x32xf32>
    %36 = arith.subf %34, %35 : vector<32x32xf32>
    %37 = arith.addf %33, %36 : vector<32x32xf32>
    %38 = vector.extract_strided_slice %4 {offsets = [8, 15], sizes = [32, 32], strides = [1, 1]} : vector<46x47xf32> to vector<32x32xf32>
    %39 = vector.extract_strided_slice %4 {offsets = [8, 0], sizes = [32, 32], strides = [1, 1]} : vector<46x47xf32> to vector<32x32xf32>
    %40 = arith.subf %38, %39 : vector<32x32xf32>
    %41 = arith.addf %37, %40 : vector<32x32xf32>
    %42 = vector.extract_strided_slice %4 {offsets = [9, 15], sizes = [32, 32], strides = [1, 1]} : vector<46x47xf32> to vector<32x32xf32>
    %43 = vector.extract_strided_slice %4 {offsets = [9, 0], sizes = [32, 32], strides = [1, 1]} : vector<46x47xf32> to vector<32x32xf32>
    %44 = arith.subf %42, %43 : vector<32x32xf32>
    %45 = arith.addf %41, %44 : vector<32x32xf32>
    %46 = vector.extract_strided_slice %4 {offsets = [10, 15], sizes = [32, 32], strides = [1, 1]} : vector<46x47xf32> to vector<32x32xf32>
    %47 = vector.extract_strided_slice %4 {offsets = [10, 0], sizes = [32, 32], strides = [1, 1]} : vector<46x47xf32> to vector<32x32xf32>
    %48 = arith.subf %46, %47 : vector<32x32xf32>
    %49 = arith.addf %45, %48 : vector<32x32xf32>
    %50 = vector.extract_strided_slice %4 {offsets = [11, 15], sizes = [32, 32], strides = [1, 1]} : vector<46x47xf32> to vector<32x32xf32>
    %51 = vector.extract_strided_slice %4 {offsets = [11, 0], sizes = [32, 32], strides = [1, 1]} : vector<46x47xf32> to vector<32x32xf32>
    %52 = arith.subf %50, %51 : vector<32x32xf32>
    %53 = arith.addf %49, %52 : vector<32x32xf32>
    %54 = vector.extract_strided_slice %4 {offsets = [12, 15], sizes = [32, 32], strides = [1, 1]} : vector<46x47xf32> to vector<32x32xf32>
    %55 = vector.extract_strided_slice %4 {offsets = [12, 1], sizes = [32, 32], strides = [1, 1]} : vector<46x47xf32> to vector<32x32xf32>
    %56 = arith.subf %54, %55 : vector<32x32xf32>
    %57 = arith.addf %53, %56 : vector<32x32xf32>
    %58 = vector.extract_strided_slice %4 {offsets = [13, 14], sizes = [32, 32], strides = [1, 1]} : vector<46x47xf32> to vector<32x32xf32>
    %59 = vector.extract_strided_slice %4 {offsets = [13, 2], sizes = [32, 32], strides = [1, 1]} : vector<46x47xf32> to vector<32x32xf32>
    %60 = arith.subf %58, %59 : vector<32x32xf32>
    %61 = arith.addf %57, %60 : vector<32x32xf32>
    %62 = vector.extract_strided_slice %4 {offsets = [14, 13], sizes = [32, 32], strides = [1, 1]} : vector<46x47xf32> to vector<32x32xf32>
    %63 = vector.extract_strided_slice %4 {offsets = [14, 3], sizes = [32, 32], strides = [1, 1]} : vector<46x47xf32> to vector<32x32xf32>
    %64 = arith.subf %62, %63 : vector<32x32xf32>
    %65 = arith.addf %61, %64 : vector<32x32xf32>
    %cst_5 = arith.constant 0.000000e+00 : f32
    %66 = vector.broadcast %cst_5 : f32 to vector<32x32xf32>
    %67 = arith.cmpf ogt, %2, %66 : vector<32x32xf32>
    %cst_6 = arith.constant 0.000000e+00 : f32
    %68 = vector.broadcast %cst_6 : f32 to vector<32x32xf32>
    %69 = arith.cmpf ogt, %65, %68 : vector<32x32xf32>
    %cst_7 = arith.constant -1.000000e+00 : f32
    %cst_8 = arith.constant 0.000000e+00 : f32
    %70 = vector.broadcast %cst_7 : f32 to vector<32x32xf32>
    %71 = vector.broadcast %cst_8 : f32 to vector<32x32xf32>
    %72 = arith.select %69, %70, %71 : vector<32x32xi1>, vector<32x32xf32>
    %cst_9 = arith.constant 1.000000e+00 : f32
    %73 = vector.broadcast %cst_9 : f32 to vector<32x32xf32>
    %74 = arith.select %67, %73, %72 : vector<32x32xi1>, vector<32x32xf32>
    %c0_10 = arith.constant 0 : index
    %c0_11 = arith.constant 0 : index
    %c0_12 = arith.constant 0 : index
    %75 = vector.load %arg3[%c0_10, %c0_11, %c0_12] : memref<1x32x32xf32, #tpu.memory_space<vmem>>, vector<1x32x32xf32>
    %76 = vector.shape_cast %75 : vector<1x32x32xf32> to vector<32x32xf32>
    %77 = vector.shape_cast %74 : vector<32x32xf32> to vector<1x32x32xf32>
    tpu.vector_store %arg3[%c0_10, %c0_11, %c0_12], %77 {strides = array<i32>} : memref<1x32x32xf32, #tpu.memory_space<vmem>>, vector<1x32x32xf32>,
    return
  }
  func.func @transform_0(%arg0: i32) -> (i32, i32, i32) {
    %c0_i32 = arith.constant 0 : i32
    %c0_i32_0 = arith.constant 0 : i32
    %c0_i32_1 = arith.constant 0 : i32
    return %arg0, %c0_i32, %c0_i32_0 : i32, i32, i32
  }
  func.func @transform_1(%arg0: i32) -> (i32, i32) {
    %c0_i32 = arith.constant 0 : i32
    %c0_i32_0 = arith.constant 0 : i32
    %c0_i32_1 = arith.constant 0 : i32
    return %c0_i32, %c0_i32_0 : i32, i32
  }
  func.func @transform_2(%arg0: i32) -> (i32, i32, i32) {
    %c0_i32 = arith.constant 0 : i32
    %c0_i32_0 = arith.constant 0 : i32
    %c0_i32_1 = arith.constant 0 : i32
    return %arg0, %c0_i32, %c0_i32_0 : i32, i32, i32
  }
}

</mosaic_0001>

<llo_original>
// kernel: tpu_custom_call.1
$region0: #{tpu_custom_call.1}
  #allocation0 [shape = 'u32[]', space=smem, size = 0x4, offset = 0x4, fixed_abs, tag = 'smem constant byte address 0x4 - core index']
  #allocation1 [shape = 'u32[72,128]{1,0:T(1,128)}', space=vmem, size = 0x9000, scoped, tag = 'internal scratch']
  %s0 = inlined_call_operand.vmem [shape: f32[2,46,46], index: 0, kind: input, shape index: {}]
  %s1 = inlined_call_operand.vmem [shape: f32[46,47], index: 1, kind: input, shape index: {}]
  %s2 = inlined_call_operand.hbm [shape: f32[2,32,32], index: 2, kind: output, shape index: {}]
  %s3 = sld [smem:[#allocation0]]
  $region41: #{tpu_custom_call.1} parent=0
    _
  %s5 = ssub.s32 1, %s3
  %s6 = scalar_select 0, %s5, %s3
  $region1: #{tpu_custom_call.1} parent=0
    #allocation2 [shape = 'u8[32768]{0}', space=vmem, size = 0x8000, scoped, tag = 'output window, operand 0']
    #allocation3 [shape = 's32[2]{0}', space=sflag, size = 0x8, scoped, tag = 'scoped memory for tpu_custom_call.1']
    %7 = vsyncpa [#allocation3], 0
    %s8 = scalar_lea.sflag [#allocation3], 1
    %9 = vsyncpa %s8, 0
    loop: start=0, step=1, limit=4
    $region2: #{tpu_custom_call.1} parent=1 // loop_pre_header
      _
    $region3: #{tpu_custom_call.1} parent=1 // loop_header
      %s11 = sphi 0, %s15
      %p12 = scmp.ge.s32.totalorder %s11, 4
      %s21 = sphi 0, %s23
      %s24 = sphi 0, %s21
      %s25 = sphi 0, %s24
      %s41 = sphi 0, %s25
      %s45 = sphi 0, %s45
      %s47 = sphi 0, %s45
      %s48 = sphi 0, %s47
      %s62 = sphi 0, %s48
      %s68 = sphi 0, %s70
      %s71 = sphi 0, %s68
      %s72 = sphi 0, %s71
      %s88 = sphi 0, %s72
    $region4: #{tpu_custom_call.1} parent=1 // loop_header_branch
      %14 = sbr.rel (%p12) target = $region8
    $region5: #{tpu_custom_call.1} parent=1 // loop_body
      %s16 = ssub.s32 %s11, 1
      %s17 = ssub.s32 %s11, 2
      %s18 = sadd.s32 %s11, 1
      %s19 = ssub.s32 %s11, %s18
      %p20 = scmp.eq.s32.totalorder %s19, 0
      %s22 = sadd.s32 %s21, 1
      %s23 = scalar_select %p20, %s21, %s22
      %p26 = pneg %p20
      %p27 = scmp.eq.s32.totalorder %s11, 1
      %p28 = por %p26, %p27
      %p29 = scmp.ne.s32.totalorder %s21, %s24
      %p30 = scmp.eq.s32.totalorder %s11, 0
      %p31 = por %p29, %p30
      %p32 = scmp.ne.s32.totalorder %s21, %s24
      %p33 = scmp.eq.s32.totalorder %s16, 1
      %p34 = por %p32, %p33
      %p35 = scmp.ne.s32.totalorder %s24, %s25
      %p36 = scmp.eq.s32.totalorder %s16, 0
      %p37 = por %p35, %p36
      %p38 = scmp.ne.s32.totalorder %s24, %s25
      %p39 = scmp.eq.s32.totalorder %s17, 1
      %p40 = por %p38, %p39
      %p42 = scmp.ne.s32.totalorder %s25, %s41
      %p43 = scmp.eq.s32.totalorder %s17, 0
      %p44 = por %p42, %p43
      %s46 = sadd.s32 %s45, 1
      %p49 = scmp.eq.s32.totalorder %s11, 1
      %p50 = scmp.ne.s32.totalorder %s45, %s47
      %p51 = scmp.eq.s32.totalorder %s11, 0
      %p52 = por %p50, %p51
      %p53 = scmp.ne.s32.totalorder %s45, %s47
      %p54 = scmp.eq.s32.totalorder %s16, 1
      %p55 = por %p53, %p54
      %p56 = scmp.ne.s32.totalorder %s47, %s48
      %p57 = scmp.eq.s32.totalorder %s16, 0
      %p58 = por %p56, %p57
      %p59 = scmp.ne.s32.totalorder %s47, %s48
      %p60 = scmp.eq.s32.totalorder %s17, 1
      %p61 = por %p59, %p60
      %p63 = scmp.ne.s32.totalorder %s48, %s62
      %p64 = scmp.eq.s32.totalorder %s17, 0
      %p65 = por %p63, %p64
      %s66 = ssub.s32 %s11, %s18
      %p67 = scmp.eq.s32.totalorder %s66, 0
      %s69 = sadd.s32 %s68, 1
      %s70 = scalar_select %p67, %s68, %s69
      %p73 = pneg %p67
      %p74 = scmp.eq.s32.totalorder %s11, 1
      %p75 = por %p73, %p74
      %p76 = scmp.ne.s32.totalorder %s68, %s71
      %p77 = scmp.eq.s32.totalorder %s11, 0
      %p78 = por %p76, %p77
      %p79 = scmp.ne.s32.totalorder %s68, %s71
      %p80 = scmp.eq.s32.totalorder %s16, 1
      %p81 = por %p79, %p80
      %p82 = scmp.ne.s32.totalorder %s71, %s72
      %p83 = scmp.eq.s32.totalorder %s16, 0
      %p84 = por %p82, %p83
      %p85 = scmp.ne.s32.totalorder %s71, %s72
      %p86 = scmp.eq.s32.totalorder %s17, 1
      %p87 = por %p85, %p86
      %p89 = scmp.ne.s32.totalorder %s72, %s88
      %p90 = scmp.eq.s32.totalorder %s17, 0
      %p91 = por %p89, %p90
      %p92 = scmp.le.s32.totalorder 1, %s11
      %p93 = scmp.lt.s32.totalorder %s11, 3
      %p94 = pnand %p92, %p93
      %p95 = pneg %p94
      // Predicated region
      $region9: #{tpu_custom_call.1} parent=5 // pred_check
        _
      $region10: #{tpu_custom_call.1} parent=5 // pred_check_branch
        %97 = sbr.rel (%p94) target = $region12
      $region11: #{tpu_custom_call.1} parent=5 // pred_region
        %s98 = ssub.s32 %s11, 1
        // Predicated region
        $region13: #{tpu_custom_call.1} parent=11 // pred_check
          %p99 = pneg %p58
        $region14: #{tpu_custom_call.1} parent=11 // pred_check_branch
          %101 = sbr.rel (%p99) target = $region16
        $region15: #{tpu_custom_call.1} parent=11 // pred_region
          _
        $region16: #{tpu_custom_call.1} parent=11 // pred_fallthru
          _
      $region12: #{tpu_custom_call.1} parent=5 // pred_fallthru
        _
      %p102 = scmp.lt.s32.totalorder %s11, 2
      // Predicated region
      $region17: #{tpu_custom_call.1} parent=5 // pred_check
        %p103 = pneg %p102
      $region18: #{tpu_custom_call.1} parent=5 // pred_check_branch
        %105 = sbr.rel (%p103) target = $region20
      $region19: #{tpu_custom_call.1} parent=5 // pred_region
        // Predicated region
        $region21: #{tpu_custom_call.1} parent=19 // pred_check
          %p106 = pneg %p31
        $region22: #{tpu_custom_call.1} parent=19 // pred_check_branch
          %108 = sbr.rel (%p106) target = $region24
        $region23: #{tpu_custom_call.1} parent=19 // pred_region
          %p109 = scmp.lt.s32.totalorder %s11, 1
          %s110 = scalar_select %p109, %s11, 1
          %s111 = smul.addr %s110, 6
          %s112 = smul.addr %s111, 8
          %s113 = scalar_lea.vmem %s0, %s112
        $region24: #{tpu_custom_call.1} parent=19 // pred_fallthru
          _
      $region20: #{tpu_custom_call.1} parent=5 // pred_fallthru
        _
      %p114 = scmp.le.s32.totalorder 1, %s11
      %p115 = scmp.lt.s32.totalorder %s11, 3
      %p116 = pnand %p114, %p115
      %p117 = pneg %p116
      // Predicated region
      $region25: #{tpu_custom_call.1} parent=5 // pred_check
        _
      $region26: #{tpu_custom_call.1} parent=5 // pred_check_branch
        %119 = sbr.rel (%p116) target = $region28
      $region27: #{tpu_custom_call.1} parent=5 // pred_region
        %s120 = ssub.s32 %s11, 1
        %p121 = scmp.lt.s32.totalorder %s16, 1
        %s122 = scalar_select %p121, %s16, 1
        %s123 = smul.addr %s122, 6
        %s124 = smul.addr %s123, 8
        %s125 = scalar_lea.vmem %s0, %s124
        %p126 = pneg %p37
        %p127 = pneg %p34
        %p128 = pneg %p58
        %p129 = pneg %p55
        %p130 = pneg %p84
        %p131 = pneg %p81
        %s132 = sand.u32 %s71, 1
        %s133 = scalar_lea.sflag [#allocation3], %s132
        %s134 = sand.u32 %s71, 1
        %s135 = smul.addr %s134, 32
        %s136 = scalar_lea.vmem [#allocation2], %s135
        %p137 = scmp.lt.s32.totalorder %s16, 1
        %s138 = scalar_select %p137, %s16, 1
        %s139 = smul.addr %s138, 6
        %s140 = smul.addr %s139, 8
        %s141 = scalar_lea.vmem %s0, %s140
        %v142 = vld [vmem:[%s141] sm:$0xff]
        %v143 = vld [vmem:[%s141 + $0x8] sm:$0xff]
        %v144 = vld [vmem:[%s141 + $0x10] sm:$0xff]
        %v145 = vld [vmem:[%s141 + $0x18] sm:$0xff]
        %v146 = vld [vmem:[%s141 + $0x20] sm:$0xff]
        %v147 = vld [vmem:[%s141 + $0x28] sm:$0x3f]
        %v148 = vld [vmem:[%s1] sm:$0xff]
        %v149 = vld [vmem:[%s1 + $0x8] sm:$0xff]
        %v150 = vld [vmem:[%s1 + $0x10] sm:$0xff]
        %v151 = vld [vmem:[%s1 + $0x18] sm:$0xff]
        %v152 = vld [vmem:[%s1 + $0x20] sm:$0xff]
        %v153 = vld [vmem:[%s1 + $0x28] sm:$0x3f]
        %vm154 = vcmask 375808
        %v156 = vsel %vm154, %v142, 0
        %v159 = vsel %vm154, %v143, 0
        %v162 = vsel %vm154, %v144, 0
        %v165 = vsel %vm154, %v145, 0
        %v168 = vsel %vm154, %v146, 0
        %v171 = vsel %vm154, %v147, 0
        %vm173 = vcmask 1045504
        %v175 = vsel %vm173, %v153, 0
        %177 = vmatpush.msra.mxu0 0.0
        %178 = vmatpush.msra.mxu0 0.0
        %179 = vmatpush.msra.mxu0 0.0
        %180 = vmatpush.msra.mxu0 0.0
        %181 = vmatpush.msra.mxu0 0.0
        %182 = vmatpush.msra.mxu0 0.0
        %183 = vmatpush.msra.mxu0 0.0
        %184 = vmatpush.msra.mxu0 0.0
        %185 = vmatpush.msra.mxu0 0.0
        %186 = vmatpush.msra.mxu0 0.0
        %187 = vmatpush.msra.mxu0 %v175
        %188 = vmatpush.msra.mxu0 %v152
        %189 = vmatpush.msra.mxu0 %v151
        %190 = vmatpush.msra.mxu0 %v150
        %191 = vmatpush.msra.mxu0 %v149
        %192 = vmatpush.msra.mxu0 %v148
        %193 = vmatmul.f32.gmra.mxu0 %v156
        %v194 = vpop.f32.mrf.mxu0
        %v195 = vadd.f32 0.0, %v194
        %196 = vmatmul.f32.gmra.mxu0 %v159
        %v197 = vpop.f32.mrf.mxu0
        %v198 = vadd.f32 0.0, %v197
        %199 = vmatmul.f32.gmra.mxu0 %v162
        %v200 = vpop.f32.mrf.mxu0
        %v201 = vadd.f32 0.0, %v200
        %202 = vmatmul.f32.gmra.mxu0 %v165
        %v203 = vpop.f32.mrf.mxu0
        %v204 = vadd.f32 0.0, %v203
        %205 = vmatmul.f32.gmra.mxu0 %v168
        %v206 = vpop.f32.mrf.mxu0
        %v207 = vadd.f32 0.0, %v206
        %208 = vmatmul.f32.gmra.mxu0 %v171
        %v209 = vpop.f32.mrf.mxu0
        %v210 = vadd.f32 0.0, %v209
        %211 = vdwg.mxu0
        %216 = vrot.lane.b32.xlu0 %v195, 8
        %v217 = vpop.permute.xlu0 %216
        %218 = vrot.lane.b32.xlu0 %v198, 8
        %v219 = vpop.permute.xlu0 %218
        %220 = vrot.lane.b32.xlu0 %v201, 8
        %v221 = vpop.permute.xlu0 %220
        %222 = vrot.lane.b32.xlu0 %v204, 8
        %v223 = vpop.permute.xlu0 %222
        %v228 = vsub.f32 %v195, %v217
        %v229 = vsub.f32 %v198, %v219
        %v230 = vsub.f32 %v201, %v221
        %v231 = vsub.f32 %v204, %v223
        %v232 = vadd.f32 %v228, 0.0
        %v233 = vadd.f32 %v229, 0.0
        %v234 = vadd.f32 %v230, 0.0
        %v235 = vadd.f32 %v231, 0.0
        %237 = vrot.lane.b32.xlu0 %v195, 10
        %v238 = vpop.permute.xlu0 %237
        %239 = vrot.lane.b32.xlu0 %v198, 10
        %v240 = vpop.permute.xlu0 %239
        %241 = vrot.lane.b32.xlu0 %v201, 10
        %v242 = vpop.permute.xlu0 %241
        %243 = vrot.lane.b32.xlu0 %v204, 10
        %v244 = vpop.permute.xlu0 %243
        %245 = vrot.lane.b32.xlu0 %v207, 10
        %v246 = vpop.permute.xlu0 %245
        %v252 = vsub.f32 %v195, %v238
        %v253 = vsub.f32 %v198, %v240
        %v254 = vsub.f32 %v201, %v242
        %v255 = vsub.f32 %v204, %v244
        %v256 = vsub.f32 %v207, %v246
        %vm262 = vcmask 1046528
        %v263 = vrot.slane %v252, 1
        %v264 = vrot.slane %v253, 1
        %v265 = vsel %vm262, %v263, %v264
        %v266 = vrot.slane %v254, 1
        %v267 = vsel %vm262, %v264, %v266
        %v268 = vrot.slane %v255, 1
        %v269 = vsel %vm262, %v266, %v268
        %v270 = vrot.slane %v256, 1
        %v271 = vsel %vm262, %v268, %v270
        %272 = vrot.lane.b32.xlu0 %v265, 127
        %v273 = vpop.permute.xlu0 %272
        %274 = vrot.lane.b32.xlu0 %v267, 127
        %v275 = vpop.permute.xlu0 %274
        %276 = vrot.lane.b32.xlu0 %v269, 127
        %v277 = vpop.permute.xlu0 %276
        %278 = vrot.lane.b32.xlu0 %v271, 127
        %v279 = vpop.permute.xlu0 %278
        %v284 = vadd.f32 %v232, %v273
        %v285 = vadd.f32 %v233, %v275
        %v286 = vadd.f32 %v234, %v277
        %v287 = vadd.f32 %v235, %v279
        %288 = vrot.lane.b32.xlu0 %v195, 12
        %v289 = vpop.permute.xlu0 %288
        %290 = vrot.lane.b32.xlu0 %v198, 12
        %v291 = vpop.permute.xlu0 %290
        %292 = vrot.lane.b32.xlu0 %v201, 12
        %v293 = vpop.permute.xlu0 %292
        %294 = vrot.lane.b32.xlu0 %v204, 12
        %v295 = vpop.permute.xlu0 %294
        %296 = vrot.lane.b32.xlu0 %v207, 12
        %v297 = vpop.permute.xlu0 %296
        %v303 = vsub.f32 %v195, %v289
        %v304 = vsub.f32 %v198, %v291
        %v305 = vsub.f32 %v201, %v293
        %v306 = vsub.f32 %v204, %v295
        %v307 = vsub.f32 %v207, %v297
        %v313 = vrot.slane %v303, 2
        %v314 = vrot.slane %v304, 2
        %v315 = vsel %vm173, %v313, %v314
        %v316 = vrot.slane %v305, 2
        %v317 = vsel %vm173, %v314, %v316
        %v318 = vrot.slane %v306, 2
        %v319 = vsel %vm173, %v316, %v318
        %v320 = vrot.slane %v307, 2
        %v321 = vsel %vm173, %v318, %v320
        %322 = vrot.lane.b32.xlu0 %v315, 126
        %v323 = vpop.permute.xlu0 %322
        %324 = vrot.lane.b32.xlu0 %v317, 126
        %v325 = vpop.permute.xlu0 %324
        %326 = vrot.lane.b32.xlu0 %v319, 126
        %v327 = vpop.permute.xlu0 %326
        %328 = vrot.lane.b32.xlu0 %v321, 126
        %v329 = vpop.permute.xlu0 %328
        %v334 = vadd.f32 %v284, %v323
        %v335 = vadd.f32 %v285, %v325
        %v336 = vadd.f32 %v286, %v327
        %v337 = vadd.f32 %v287, %v329
        %338 = vrot.lane.b32.xlu0 %v195, 14
        %v339 = vpop.permute.xlu0 %338
        %340 = vrot.lane.b32.xlu0 %v198, 14
        %v341 = vpop.permute.xlu0 %340
        %342 = vrot.lane.b32.xlu0 %v201, 14
        %v343 = vpop.permute.xlu0 %342
        %344 = vrot.lane.b32.xlu0 %v204, 14
        %v345 = vpop.permute.xlu0 %344
        %346 = vrot.lane.b32.xlu0 %v207, 14
        %v347 = vpop.permute.xlu0 %346
        %v353 = vsub.f32 %v195, %v339
        %v354 = vsub.f32 %v198, %v341
        %v355 = vsub.f32 %v201, %v343
        %v356 = vsub.f32 %v204, %v345
        %v357 = vsub.f32 %v207, %v347
        %vm363 = vcmask 1044480
        %v364 = vrot.slane %v353, 3
        %v365 = vrot.slane %v354, 3
        %v366 = vsel %vm363, %v364, %v365
        %v367 = vrot.slane %v355, 3
        %v368 = vsel %vm363, %v365, %v367
        %v369 = vrot.slane %v356, 3
        %v370 = vsel %vm363, %v367, %v369
        %v371 = vrot.slane %v357, 3
        %v372 = vsel %vm363, %v369, %v371
        %373 = vrot.lane.b32.xlu0 %v366, 125
        %v374 = vpop.permute.xlu0 %373
        %375 = vrot.lane.b32.xlu0 %v368, 125
        %v376 = vpop.permute.xlu0 %375
        %377 = vrot.lane.b32.xlu0 %v370, 125
        %v378 = vpop.permute.xlu0 %377
        %379 = vrot.lane.b32.xlu0 %v372, 125
        %v380 = vpop.permute.xlu0 %379
        %v385 = vadd.f32 %v334, %v374
        %v386 = vadd.f32 %v335, %v376
        %v387 = vadd.f32 %v336, %v378
        %v388 = vadd.f32 %v337, %v380
        %389 = vrot.lane.b32.xlu0 %v195, 15
        %v390 = vpop.permute.xlu0 %389
        %391 = vrot.lane.b32.xlu0 %v198, 15
        %v392 = vpop.permute.xlu0 %391
        %393 = vrot.lane.b32.xlu0 %v201, 15
        %v394 = vpop.permute.xlu0 %393
        %395 = vrot.lane.b32.xlu0 %v204, 15
        %v396 = vpop.permute.xlu0 %395
        %397 = vrot.lane.b32.xlu0 %v207, 15
        %v398 = vpop.permute.xlu0 %397
        %v404 = vsub.f32 %v195, %v390
        %v405 = vsub.f32 %v198, %v392
        %v406 = vsub.f32 %v201, %v394
        %v407 = vsub.f32 %v204, %v396
        %v408 = vsub.f32 %v207, %v398
        %vm414 = vcmask 1043456
        %v415 = vrot.slane %v404, 4
        %v416 = vrot.slane %v405, 4
        %v417 = vsel %vm414, %v415, %v416
        %v418 = vrot.slane %v406, 4
        %v419 = vsel %vm414, %v416, %v418
        %v420 = vrot.slane %v407, 4
        %v421 = vsel %vm414, %v418, %v420
        %v422 = vrot.slane %v408, 4
        %v423 = vsel %vm414, %v420, %v422
        %424 = vrot.lane.b32.xlu0 %v417, 125
        %v425 = vpop.permute.xlu0 %424
        %426 = vrot.lane.b32.xlu0 %v419, 125
        %v427 = vpop.permute.xlu0 %426
        %428 = vrot.lane.b32.xlu0 %v421, 125
        %v429 = vpop.permute.xlu0 %428
        %430 = vrot.lane.b32.xlu0 %v423, 125
        %v431 = vpop.permute.xlu0 %430
        %v436 = vadd.f32 %v385, %v425
        %v437 = vadd.f32 %v386, %v427
        %v438 = vadd.f32 %v387, %v429
        %v439 = vadd.f32 %v388, %v431
        %vm440 = vcmask 1042432
        %v441 = vrot.slane %v404, 5
        %v442 = vrot.slane %v405, 5
        %v443 = vsel %vm440, %v441, %v442
        %v444 = vrot.slane %v406, 5
        %v445 = vsel %vm440, %v442, %v444
        %v446 = vrot.slane %v407, 5
        %v447 = vsel %vm440, %v444, %v446
        %v448 = vrot.slane %v408, 5
        %v449 = vsel %vm440, %v446, %v448
        %450 = vrot.lane.b32.xlu0 %v443, 125
        %v451 = vpop.permute.xlu0 %450
        %452 = vrot.lane.b32.xlu0 %v445, 125
        %v453 = vpop.permute.xlu0 %452
        %454 = vrot.lane.b32.xlu0 %v447, 125
        %v455 = vpop.permute.xlu0 %454
        %456 = vrot.lane.b32.xlu0 %v449, 125
        %v457 = vpop.permute.xlu0 %456
        %v462 = vadd.f32 %v436, %v451
        %v463 = vadd.f32 %v437, %v453
        %v464 = vadd.f32 %v438, %v455
        %v465 = vadd.f32 %v439, %v457
        %vm466 = vcmask 1041408
        %v467 = vrot.slane %v404, 6
        %v468 = vrot.slane %v405, 6
        %v469 = vsel %vm466, %v467, %v468
        %v470 = vrot.slane %v406, 6
        %v471 = vsel %vm466, %v468, %v470
        %v472 = vrot.slane %v407, 6
        %v473 = vsel %vm466, %v470, %v472
        %v474 = vrot.slane %v408, 6
        %v475 = vsel %vm466, %v472, %v474
        %476 = vrot.lane.b32.xlu0 %v469, 125
        %v477 = vpop.permute.xlu0 %476
        %478 = vrot.lane.b32.xlu0 %v471, 125
        %v479 = vpop.permute.xlu0 %478
        %480 = vrot.lane.b32.xlu0 %v473, 125
        %v481 = vpop.permute.xlu0 %480
        %482 = vrot.lane.b32.xlu0 %v475, 125
        %v483 = vpop.permute.xlu0 %482
        %v488 = vadd.f32 %v462, %v477
        %v489 = vadd.f32 %v463, %v479
        %v490 = vadd.f32 %v464, %v481
        %v491 = vadd.f32 %v465, %v483
        %vm492 = vcmask 1040384
        %v493 = vrot.slane %v404, 7
        %v494 = vrot.slane %v405, 7
        %v495 = vsel %vm492, %v493, %v494
        %v496 = vrot.slane %v406, 7
        %v497 = vsel %vm492, %v494, %v496
        %v498 = vrot.slane %v407, 7
        %v499 = vsel %vm492, %v496, %v498
        %v500 = vrot.slane %v408, 7
        %v501 = vsel %vm492, %v498, %v500
        %502 = vrot.lane.b32.xlu0 %v495, 125
        %v503 = vpop.permute.xlu0 %502
        %504 = vrot.lane.b32.xlu0 %v497, 125
        %v505 = vpop.permute.xlu0 %504
        %506 = vrot.lane.b32.xlu0 %v499, 125
        %v507 = vpop.permute.xlu0 %506
        %508 = vrot.lane.b32.xlu0 %v501, 125
        %v509 = vpop.permute.xlu0 %508
        %v514 = vadd.f32 %v488, %v503
        %v515 = vadd.f32 %v489, %v505
        %v516 = vadd.f32 %v490, %v507
        %v517 = vadd.f32 %v491, %v509
        %518 = vrot.lane.b32.xlu0 %v405, 125
        %v519 = vpop.permute.xlu0 %518
        %520 = vrot.lane.b32.xlu0 %v406, 125
        %v521 = vpop.permute.xlu0 %520
        %522 = vrot.lane.b32.xlu0 %v407, 125
        %v523 = vpop.permute.xlu0 %522
        %524 = vrot.lane.b32.xlu0 %v408, 125
        %v525 = vpop.permute.xlu0 %524
        %v530 = vadd.f32 %v514, %v519
        %v531 = vadd.f32 %v515, %v521
        %v532 = vadd.f32 %v516, %v523
        %v533 = vadd.f32 %v517, %v525
        %535 = vrot.lane.b32.xlu0 %v210, 15
        %v536 = vpop.permute.xlu0 %535
        %v538 = vsub.f32 %v210, %v536
        %v540 = vrot.slane %v405, 1
        %v541 = vrot.slane %v406, 1
        %v542 = vsel %vm262, %v540, %v541
        %v543 = vrot.slane %v407, 1
        %v544 = vsel %vm262, %v541, %v543
        %v545 = vrot.slane %v408, 1
        %v546 = vsel %vm262, %v543, %v545
        %v547 = vrot.slane %v538, 1
        %v548 = vsel %vm262, %v545, %v547
        %549 = vrot.lane.b32.xlu0 %v542, 125
        %v550 = vpop.permute.xlu0 %549
        %551 = vrot.lane.b32.xlu0 %v544, 125
        %v552 = vpop.permute.xlu0 %551
        %553 = vrot.lane.b32.xlu0 %v546, 125
        %v554 = vpop.permute.xlu0 %553
        %555 = vrot.lane.b32.xlu0 %v548, 125
        %v556 = vpop.permute.xlu0 %555
        %v561 = vadd.f32 %v530, %v550
        %v562 = vadd.f32 %v531, %v552
        %v563 = vadd.f32 %v532, %v554
        %v564 = vadd.f32 %v533, %v556
        %v565 = vrot.slane %v405, 2
        %v566 = vrot.slane %v406, 2
        %v567 = vsel %vm173, %v565, %v566
        %v568 = vrot.slane %v407, 2
        %v569 = vsel %vm173, %v566, %v568
        %v570 = vrot.slane %v408, 2
        %v571 = vsel %vm173, %v568, %v570
        %v572 = vrot.slane %v538, 2
        %v573 = vsel %vm173, %v570, %v572
        %574 = vrot.lane.b32.xlu0 %v567, 125
        %v575 = vpop.permute.xlu0 %574
        %576 = vrot.lane.b32.xlu0 %v569, 125
        %v577 = vpop.permute.xlu0 %576
        %578 = vrot.lane.b32.xlu0 %v571, 125
        %v579 = vpop.permute.xlu0 %578
        %580 = vrot.lane.b32.xlu0 %v573, 125
        %v581 = vpop.permute.xlu0 %580
        %v586 = vadd.f32 %v561, %v575
        %v587 = vadd.f32 %v562, %v577
        %v588 = vadd.f32 %v563, %v579
        %v589 = vadd.f32 %v564, %v581
        %v590 = vrot.slane %v405, 3
        %v591 = vrot.slane %v406, 3
        %v592 = vsel %vm363, %v590, %v591
        %v593 = vrot.slane %v407, 3
        %v594 = vsel %vm363, %v591, %v593
        %v595 = vrot.slane %v408, 3
        %v596 = vsel %vm363, %v593, %v595
        %v597 = vrot.slane %v538, 3
        %v598 = vsel %vm363, %v595, %v597
        %599 = vrot.lane.b32.xlu0 %v592, 125
        %v600 = vpop.permute.xlu0 %599
        %601 = vrot.lane.b32.xlu0 %v594, 125
        %v602 = vpop.permute.xlu0 %601
        %603 = vrot.lane.b32.xlu0 %v596, 125
        %v604 = vpop.permute.xlu0 %603
        %605 = vrot.lane.b32.xlu0 %v598, 125
        %v606 = vpop.permute.xlu0 %605
        %v611 = vadd.f32 %v586, %v600
        %v612 = vadd.f32 %v587, %v602
        %v613 = vadd.f32 %v588, %v604
        %v614 = vadd.f32 %v589, %v606
        %615 = vrot.lane.b32.xlu0 %v210, 14
        %v616 = vpop.permute.xlu0 %615
        %v618 = vsub.f32 %v210, %v616
        %v620 = vrot.slane %v354, 4
        %v621 = vrot.slane %v355, 4
        %v622 = vsel %vm414, %v620, %v621
        %v623 = vrot.slane %v356, 4
        %v624 = vsel %vm414, %v621, %v623
        %v625 = vrot.slane %v357, 4
        %v626 = vsel %vm414, %v623, %v625
        %v627 = vrot.slane %v618, 4
        %v628 = vsel %vm414, %v625, %v627
        %629 = vrot.lane.b32.xlu0 %v622, 125
        %v630 = vpop.permute.xlu0 %629
        %631 = vrot.lane.b32.xlu0 %v624, 125
        %v632 = vpop.permute.xlu0 %631
        %633 = vrot.lane.b32.xlu0 %v626, 125
        %v634 = vpop.permute.xlu0 %633
        %635 = vrot.lane.b32.xlu0 %v628, 125
        %v636 = vpop.permute.xlu0 %635
        %v641 = vadd.f32 %v611, %v630
        %v642 = vadd.f32 %v612, %v632
        %v643 = vadd.f32 %v613, %v634
        %v644 = vadd.f32 %v614, %v636
        %645 = vrot.lane.b32.xlu0 %v210, 12
        %v646 = vpop.permute.xlu0 %645
        %v648 = vsub.f32 %v210, %v646
        %v650 = vrot.slane %v304, 5
        %v651 = vrot.slane %v305, 5
        %v652 = vsel %vm440, %v650, %v651
        %v653 = vrot.slane %v306, 5
        %v654 = vsel %vm440, %v651, %v653
        %v655 = vrot.slane %v307, 5
        %v656 = vsel %vm440, %v653, %v655
        %v657 = vrot.slane %v648, 5
        %v658 = vsel %vm440, %v655, %v657
        %659 = vrot.lane.b32.xlu0 %v652, 126
        %v660 = vpop.permute.xlu0 %659
        %661 = vrot.lane.b32.xlu0 %v654, 126
        %v662 = vpop.permute.xlu0 %661
        %663 = vrot.lane.b32.xlu0 %v656, 126
        %v664 = vpop.permute.xlu0 %663
        %665 = vrot.lane.b32.xlu0 %v658, 126
        %v666 = vpop.permute.xlu0 %665
        %v671 = vadd.f32 %v641, %v660
        %v672 = vadd.f32 %v642, %v662
        %v673 = vadd.f32 %v643, %v664
        %v674 = vadd.f32 %v644, %v666
        %675 = vrot.lane.b32.xlu0 %v210, 10
        %v676 = vpop.permute.xlu0 %675
        %v678 = vsub.f32 %v210, %v676
        %v680 = vrot.slane %v253, 6
        %v681 = vrot.slane %v254, 6
        %v682 = vsel %vm466, %v680, %v681
        %v683 = vrot.slane %v255, 6
        %v684 = vsel %vm466, %v681, %v683
        %v685 = vrot.slane %v256, 6
        %v686 = vsel %vm466, %v683, %v685
        %v687 = vrot.slane %v678, 6
        %v688 = vsel %vm466, %v685, %v687
        %689 = vrot.lane.b32.xlu0 %v682, 127
        %v690 = vpop.permute.xlu0 %689
        %691 = vrot.lane.b32.xlu0 %v684, 127
        %v692 = vpop.permute.xlu0 %691
        %693 = vrot.lane.b32.xlu0 %v686, 127
        %v694 = vpop.permute.xlu0 %693
        %695 = vrot.lane.b32.xlu0 %v688, 127
        %v696 = vpop.permute.xlu0 %695
        %v701 = vadd.f32 %v671, %v690
        %v702 = vadd.f32 %v672, %v692
        %v703 = vadd.f32 %v673, %v694
        %v704 = vadd.f32 %v674, %v696
        %vm705 = vcmp.gt.f32.partialorder %v142, 0.0
        %vm706 = vcmp.gt.f32.partialorder %v143, 0.0
        %vm707 = vcmp.gt.f32.partialorder %v144, 0.0
        %vm708 = vcmp.gt.f32.partialorder %v145, 0.0
        %vm709 = vcmp.gt.f32.partialorder %v146, 0.0
        %vm710 = vcmp.gt.f32.partialorder %v701, 0.0
        %vm711 = vcmp.gt.f32.partialorder %v702, 0.0
        %vm712 = vcmp.gt.f32.partialorder %v703, 0.0
        %vm713 = vcmp.gt.f32.partialorder %v704, 0.0
        %v714 = vsel %vm710, -1.0, 0.0
        %v715 = vsel %vm711, -1.0, 0.0
        %v716 = vsel %vm712, -1.0, 0.0
        %v717 = vsel %vm713, -1.0, 0.0
        %v722 = vrot.slane %v714, 1
        %v723 = vrot.slane %v715, 1
        %v724 = vsel %vm262, %v722, %v723
        %v725 = vrot.slane %v716, 1
        %v726 = vsel %vm262, %v723, %v725
        %v727 = vrot.slane %v717, 1
        %v728 = vsel %vm262, %v725, %v727
        %729 = vrot.lane.b32.xlu0 %v722, 123
        %v730 = vpop.permute.xlu0 %729
        %731 = vrot.lane.b32.xlu0 %v724, 123
        %v732 = vpop.permute.xlu0 %731
        %733 = vrot.lane.b32.xlu0 %v726, 123
        %v734 = vpop.permute.xlu0 %733
        %735 = vrot.lane.b32.xlu0 %v728, 123
        %v736 = vpop.permute.xlu0 %735
        %737 = vrot.lane.b32.xlu0 %v727, 123
        %v738 = vpop.permute.xlu0 %737
        %v744 = vsel %vm705, 1.0, %v730
        %v745 = vsel %vm706, 1.0, %v732
        %v746 = vsel %vm707, 1.0, %v734
        %v747 = vsel %vm708, 1.0, %v736
        %v748 = vsel %vm709, 1.0, %v738
        %754 = vrot.lane.b32.xlu0 %v744, 121
        %v755 = vpop.permute.xlu0 %754
        %756 = vrot.lane.b32.xlu0 %v745, 121
        %v757 = vpop.permute.xlu0 %756
        %758 = vrot.lane.b32.xlu0 %v746, 121
        %v759 = vpop.permute.xlu0 %758
        %760 = vrot.lane.b32.xlu0 %v747, 121
        %v761 = vpop.permute.xlu0 %760
        %762 = vrot.lane.b32.xlu0 %v748, 121
        %v763 = vpop.permute.xlu0 %762
        %vm769 = vcmask 261127
        %770 = vst.msk [vmem:[%s136 - $0x7] sm:$0x80] %vm769, %v755
        %vm771 = vcmask 261120
        %772 = vst.msk [vmem:[%s136 + $0x1] sm:$0xff] %vm771, %v757
        %773 = vst.msk [vmem:[%s136 + $0x9] sm:$0xff] %vm771, %v759
        %774 = vst.msk [vmem:[%s136 + $0x11] sm:$0xff] %vm771, %v761
        %vm775 = vcmask 260096
        %776 = vst.msk [vmem:[%s136 + $0x19] sm:$0x7f] %vm775, %v763
        %s777 = sand.u32 %s71, 1
        %s778 = scalar_lea.sflag [#allocation3], %s777
        %s779 = sand.u32 %s71, 1
        %s780 = smul.addr %s779, 32
        %s781 = scalar_lea.vmem [#allocation2], %s780
        // Predicated region
        $region29: #{tpu_custom_call.1} parent=27 // pred_check
          %p782 = pneg %p81
        $region30: #{tpu_custom_call.1} parent=27 // pred_check_branch
          %784 = sbr.rel (%p782) target = $region32
        $region31: #{tpu_custom_call.1} parent=27 // pred_region
          %786 = vsyncadd %s778, 0
          %s787 = smul.addr %s16, 4
          %s788 = smul.addr %s787, 8
          %s789 = scalar_lea.hbm %s2, %s788
          %s790 = sshll.u32 %s781, 4
          %s791 = int_to_ptr.vmem [resolvable:$true] %s790
          %s792 = sshll.u32 %s789, 4
          %s793 = int_to_ptr.hbm [resolvable:$true] %s792
          %798 = dma.vmem_to_hbm [thread:$0]  %s791, 512, %s793, %s778, 128, 128, 8
        $region32: #{tpu_custom_call.1} parent=27 // pred_fallthru
          _
      $region28: #{tpu_custom_call.1} parent=5 // pred_fallthru
        _
      %p799 = scmp.le.s32.totalorder 2, %s11
      // Predicated region
      $region33: #{tpu_custom_call.1} parent=5 // pred_check
        %p800 = pneg %p799
      $region34: #{tpu_custom_call.1} parent=5 // pred_check_branch
        %802 = sbr.rel (%p800) target = $region36
      $region35: #{tpu_custom_call.1} parent=5 // pred_region
        %s803 = ssub.s32 %s11, 2
        // Predicated region
        $region37: #{tpu_custom_call.1} parent=35 // pred_check
          %p804 = pneg %p87
        $region38: #{tpu_custom_call.1} parent=35 // pred_check_branch
          %806 = sbr.rel (%p804) target = $region40
        $region39: #{tpu_custom_call.1} parent=35 // pred_region
          %s807 = sand.u32 %s72, 1
          %s808 = scalar_lea.sflag [#allocation3], %s807
          %s809 = sand.u32 %s72, 1
          %s810 = smul.addr %s809, 32
          %s811 = scalar_lea.vmem [#allocation2], %s810
          %813 = dma.done %s808, 512
        $region40: #{tpu_custom_call.1} parent=35 // pred_fallthru
          _
      $region36: #{tpu_custom_call.1} parent=5 // pred_fallthru
        _
    $region6: #{tpu_custom_call.1} parent=1 // loop_footer
      %s15 = sadd.s32 1, %s11
    $region7: #{tpu_custom_call.1} parent=1 // loop_footer_branch
      %10 = sbr.rel target = $region3
    $region8: #{tpu_custom_call.1} parent=1 // loop_exit
      _
    %814 = vsyncpa [#allocation3], 1
    %s815 = scalar_lea.sflag [#allocation3], 1
    %816 = vsyncpa %s815, 1

</llo_original>
